<compile_context>
chip_gen: v6e
topology: v6e:2x2x1
jax: 0.10.0
libtpu: 0.0.40
codegen_flags: <defaults>
</compile_context>

<pallas_src>
import jax
import jax.numpy as jnp
from jax.experimental import pallas as pl
from jax.experimental.pallas import tpu as pltpu


def _round_up(x, m):
    return (x + m - 1) // m * m


def value_net_kernel(obs_ref, w1_ref, b1_ref, w2_ref, b2_ref, w3_ref, b3_ref,
                     out_ref):
    # obs_ref: (TILE_B, D); w1: (D, H1p); w2: (H1p, H2p); w3: (H2p, 1)
    # b1/b2: (1, H1p)/(1, H2p); b3: (1, 1); out_ref: (1, TILE_B)
    x = obs_ref[...]

    # Layer 1 (MXU), f32 accumulate, f32 bias/ReLU.
    h1 = jnp.dot(x, w1_ref[...], preferred_element_type=jnp.float32)
    h1 = jnp.maximum(h1 + b1_ref[...], 0.0)                  # (TILE_B, H1p) f32

    # Layer 2 (MXU). Feed the MXU in the weights' dtype (bf16 or f32).
    h2 = jnp.dot(h1.astype(w2_ref.dtype), w2_ref[...],
                 preferred_element_type=jnp.float32)
    h2 = jnp.maximum(h2 + b2_ref[...], 0.0)                  # (TILE_B, H2p) f32

    # Value head (H2p -> 1) off the MXU: aligned XLU transpose puts batch on
    # the lane axis, then VPU multiply + cross-sublane reduce. Result is a
    # lane-dense (1, TILE_B) row -> single unmasked store path.
    h2t = h2.T                                               # (H2p, TILE_B)
    v = jnp.sum(h2t * w3_ref[...], axis=0, keepdims=True)    # (1, TILE_B)
    out_ref[...] = (v + b3_ref[...]).astype(out_ref.dtype)


def value_network_forward(obs, params, *, tile_b=512,
                          compute_dtype=jnp.float32):
    """obs: (B, obs_dim) f32. params: dict w1,b1,w2,b2,w3,b3 (unpadded).
    Returns value estimates of shape (B,), matching `.squeeze(-1)`.
    compute_dtype=jnp.bfloat16 is recommended on v5e/v6e (f32 accumulate)."""
    obs = jnp.asarray(obs, jnp.float32)
    B, D = obs.shape
    w1, b1 = params["w1"], params["b1"]
    w2, b2 = params["w2"], params["b2"]
    w3, b3 = params["w3"], params["b3"]
    H1, H2 = w1.shape[1], w2.shape[1]
    H1p, H2p = _round_up(H1, 128), _round_up(H2, 128)

    # Zero-pad hidden widths to full 128-lane vregs / MXU tiles (exact no-op).
    w1p = jnp.zeros((D, H1p), jnp.float32).at[:, :H1].set(w1).astype(compute_dtype)
    b1p = jnp.zeros((1, H1p), jnp.float32).at[:, :H1].set(b1)
    w2p = jnp.zeros((H1p, H2p), jnp.float32).at[:H1, :H2].set(w2).astype(compute_dtype)
    b2p = jnp.zeros((1, H2p), jnp.float32).at[:, :H2].set(b2)
    w3p = jnp.zeros((H2p, 1), jnp.float32).at[:H2, :].set(w3)   # stays f32 (VPU/XLU path)
    b3p = jnp.asarray(b3, jnp.float32).reshape(1, 1)

    # Batch tile: multiple of 128 (lane-dense output rows); clamp for tiny B.
    tile_b = max(128, min(_round_up(tile_b, 128), _round_up(B, 128)))
    b_pad = _round_up(B, tile_b)
    if b_pad != B:  # only pay the pad copy when the batch isn't tile-aligned
        obs = jnp.pad(obs, ((0, b_pad - B), (0, 0)))
    obs = obs.astype(compute_dtype)
    num_tiles = b_pad // tile_b

    itemsize = jnp.dtype(compute_dtype).itemsize
    cost = pl.CostEstimate(
        flops=2 * b_pad * (D * H1p + H1p * H2p + H2p),
        transcendentals=0,
        bytes_accessed=(b_pad * D * itemsize            # obs in
                        + b_pad * 4                     # values out
                        + (D * H1p + H1p * H2p) * itemsize
                        + (H1p + H2p + H2p + 1) * 4))   # biases + w3

    resident = lambda shape: pl.BlockSpec(shape, lambda i: (0, 0))

    out = pl.pallas_call(
        value_net_kernel,
        out_shape=jax.ShapeDtypeStruct((num_tiles, tile_b), jnp.float32),
        grid=(num_tiles,),
        in_specs=[
            # Streamed per grid step (auto double-buffered).
            # TODO(synk): if obs DMA is still exposed at huge B, add
            # pipeline_mode=pl.Buffered(3) here.
            pl.BlockSpec((tile_b, D), lambda i: (i, 0)),
            # Weights/biases: constant index_map -> fetched once, VMEM-resident.
            resident(w1p.shape), resident(b1p.shape),
            resident(w2p.shape), resident(b2p.shape),
            resident(w3p.shape), resident(b3p.shape),
        ],
        out_specs=pl.BlockSpec((1, tile_b), lambda i: (i, 0)),
        compiler_params=pltpu.CompilerParams(
            dimension_semantics=("parallel",)),
        cost_estimate=cost,
    )(obs, w1p, b1p, w2p, b2p, w3p, b3p)

    # (num_tiles, tile_b) -> (b_pad,) -> drop batch padding -> squeeze(-1) done.
    return out.reshape(b_pad)[:B]


def init_params(key, obs_dim, hidden_sizes=(64, 64)):
    """PyTorch nn.Linear default init: U(-1/sqrt(fan_in), 1/sqrt(fan_in)).
    Weights stored as (in, out); biases as (1, out)."""
    sizes = (obs_dim,) + tuple(hidden_sizes) + (1,)
    keys = jax.random.split(key, 2 * (len(sizes) - 1))
    params = {}
    names = ["1", "2", "3"]
    for i, (fan_in, fan_out) in enumerate(zip(sizes[:-1], sizes[1:])):
        bound = 1.0 / jnp.sqrt(jnp.float32(fan_in))
        w = jax.random.uniform(keys[2 * i], (fan_in, fan_out),
                               minval=-bound, maxval=bound, dtype=jnp.float32)
        b = jax.random.uniform(keys[2 * i + 1], (1, fan_out),
                               minval=-bound, maxval=bound, dtype=jnp.float32)
        params["w" + names[i]] = w
        params["b" + names[i]] = b
    return params


def reference_forward(obs, params):
    h1 = jnp.maximum(obs @ params["w1"] + params["b1"], 0.0)
    h2 = jnp.maximum(h1 @ params["w2"] + params["b2"], 0.0)
    return (h2 @ params["w3"] + params["b3"])[:, 0]


if __name__ == "__main__":
    key = jax.random.PRNGKey(0)
    k_obs, k_params = jax.random.split(key)

    batch, obs_dim = 8, 16
    obs = jax.random.normal(k_obs, (batch, obs_dim), dtype=jnp.float32)
    params = init_params(k_params, obs_dim, hidden_sizes=(64, 64))

    ref = reference_forward(obs, params)

    # f32 path — bit-for-bit-ish against the pure-JAX reference.
    values = jax.block_until_ready(value_network_forward(obs, params))
    assert values.shape == (batch,)
    assert jnp.allclose(values, ref, atol=1e-5, rtol=1e-5)

    # bf16 MXU-operand path (recommended on v5e/v6e), f32 accumulate.
    values_bf16 = jax.block_until_ready(
        value_network_forward(obs, params, compute_dtype=jnp.bfloat16))
    assert values_bf16.shape == (batch,)
    assert jnp.allclose(values_bf16, ref, atol=5e-2, rtol=5e-2)

    print("KERNEL_OK")
</pallas_src>

<mosaic_0001>
module attributes {stable_mosaic.version = 11 : i64} {
  func.func @value_net_kernel(%arg0: i32, %arg1: memref<128x16xf32, #tpu.memory_space<vmem>>, %arg2: memref<16x128xf32, #tpu.memory_space<vmem>>, %arg3: memref<1x128xf32, #tpu.memory_space<vmem>>, %arg4: memref<128x128xf32, #tpu.memory_space<vmem>>, %arg5: memref<1x128xf32, #tpu.memory_space<vmem>>, %arg6: memref<128x1xf32, #tpu.memory_space<vmem>>, %arg7: memref<1x1xf32, #tpu.memory_space<vmem>>, %arg8: memref<1x128xf32, #tpu.memory_space<vmem>>) attributes {dimension_semantics = [#tpu.dimension_semantics<parallel>], iteration_bounds = array<i64: 1>, scalar_prefetch = 0 : i64, scratch_operands = 0 : i64, tpu.core_type = #tpu.core_type<tc>, window_params = [{transform_indices = @transform_0, window_bounds = array<i64: 128, 16>}, {pipeline_mode = #tpu.pipeline_mode<synchronous>, transform_indices = @transform_1, window_bounds = array<i64: 16, 128>}, {pipeline_mode = #tpu.pipeline_mode<synchronous>, transform_indices = @transform_2, window_bounds = array<i64: 1, 128>}, {pipeline_mode = #tpu.pipeline_mode<synchronous>, transform_indices = @transform_3, window_bounds = array<i64: 128, 128>}, {pipeline_mode = #tpu.pipeline_mode<synchronous>, transform_indices = @transform_4, window_bounds = array<i64: 1, 128>}, {pipeline_mode = #tpu.pipeline_mode<synchronous>, transform_indices = @transform_5, window_bounds = array<i64: 128, 1>}, {pipeline_mode = #tpu.pipeline_mode<synchronous>, transform_indices = @transform_6, window_bounds = array<i64: 1, 1>}, {transform_indices = @transform_7, window_bounds = array<i64: 1, 128>}]} {
    %c0 = arith.constant 0 : index
    %c0_0 = arith.constant 0 : index
    %0 = vector.load %arg1[%c0, %c0_0] : memref<128x16xf32, #tpu.memory_space<vmem>>, vector<128x16xf32>
    %c0_1 = arith.constant 0 : index
    %c0_2 = arith.constant 0 : index
    %1 = vector.load %arg2[%c0_1, %c0_2] : memref<16x128xf32, #tpu.memory_space<vmem>>, vector<16x128xf32>
    %cst = arith.constant dense<0.000000e+00> : vector<128x128xf32>
    %2 = tpu.matmul %0, %1, %cst {dimension_numbers = #tpu.dot_dimension_numbers<[1], [0], [0], [1], [0, 0, 1, 1], [], []>} : vector<128x16xf32>, vector<16x128xf32>, vector<128x128xf32> -> vector<128x128xf32>
    %c0_3 = arith.constant 0 : index
    %c0_4 = arith.constant 0 : index
    %3 = vector.load %arg3[%c0_3, %c0_4] : memref<1x128xf32, #tpu.memory_space<vmem>>, vector<1x128xf32>
    %4 = vector.broadcast %3 : vector<1x128xf32> to vector<128x128xf32>
    %5 = arith.addf %2, %4 : vector<128x128xf32>
    %cst_5 = arith.constant 0.000000e+00 : f32
    %6 = vector.broadcast %cst_5 : f32 to vector<128x128xf32>
    %7 = arith.maximumf %5, %6 : vector<128x128xf32>
    %c0_6 = arith.constant 0 : index
    %c0_7 = arith.constant 0 : index
    %8 = vector.load %arg4[%c0_6, %c0_7] : memref<128x128xf32, #tpu.memory_space<vmem>>, vector<128x128xf32>
    %cst_8 = arith.constant dense<0.000000e+00> : vector<128x128xf32>
    %9 = tpu.matmul %7, %8, %cst_8 {dimension_numbers = #tpu.dot_dimension_numbers<[1], [0], [0], [1], [0, 0, 1, 1], [], []>} : vector<128x128xf32>, vector<128x128xf32>, vector<128x128xf32> -> vector<128x128xf32>
    %c0_9 = arith.constant 0 : index
    %c0_10 = arith.constant 0 : index
    %10 = vector.load %arg5[%c0_9, %c0_10] : memref<1x128xf32, #tpu.memory_space<vmem>>, vector<1x128xf32>
    %11 = vector.broadcast %10 : vector<1x128xf32> to vector<128x128xf32>
    %12 = arith.addf %9, %11 : vector<128x128xf32>
    %cst_11 = arith.constant 0.000000e+00 : f32
    %13 = vector.broadcast %cst_11 : f32 to vector<128x128xf32>
    %14 = arith.maximumf %12, %13 : vector<128x128xf32>
    %15 = tpu.transpose %14, [1, 0] : vector<128x128xf32> -> vector<128x128xf32>
    %c0_12 = arith.constant 0 : index
    %c0_13 = arith.constant 0 : index
    %16 = vector.load %arg6[%c0_12, %c0_13] : memref<128x1xf32, #tpu.memory_space<vmem>>, vector<128x1xf32>
    %17 = vector.broadcast %16 : vector<128x1xf32> to vector<128x128xf32>
    %18 = arith.mulf %15, %17 : vector<128x128xf32>
    %cst_14 = arith.constant dense<0.000000e+00> : vector<128xf32>
    %19 = vector.multi_reduction <add>, %18, %cst_14 [0] : vector<128x128xf32> to vector<128xf32>
    %20 = vector.shape_cast %19 : vector<128xf32> to vector<1x128xf32>
    %c0_15 = arith.constant 0 : index
    %c0_16 = arith.constant 0 : index
    %21 = vector.load %arg7[%c0_15, %c0_16] : memref<1x1xf32, #tpu.memory_space<vmem>>, vector<1x1xf32>
    %22 = vector.broadcast %21 : vector<1x1xf32> to vector<1x128xf32>
    %23 = arith.addf %20, %22 : vector<1x128xf32>
    %c0_17 = arith.constant 0 : index
    %c0_18 = arith.constant 0 : index
    %24 = vector.load %arg8[%c0_17, %c0_18] : memref<1x128xf32, #tpu.memory_space<vmem>>, vector<1x128xf32>
    tpu.vector_store %arg8[%c0_17, %c0_18], %23 {strides = array<i32>} : memref<1x128xf32, #tpu.memory_space<vmem>>, vector<1x128xf32>,
    return
  }
  func.func @transform_0(%arg0: i32) -> (i32, i32) {
    %c0_i32 = arith.constant 0 : i32
    %c0_i32_0 = arith.constant 0 : i32
    return %arg0, %c0_i32 : i32, i32
  }
  func.func @transform_1(%arg0: i32) -> (i32, i32) {
    %c0_i32 = arith.constant 0 : i32
    %c0_i32_0 = arith.constant 0 : i32
    %c0_i32_1 = arith.constant 0 : i32
    return %c0_i32, %c0_i32_0 : i32, i32
  }
  func.func @transform_2(%arg0: i32) -> (i32, i32) {
    %c0_i32 = arith.constant 0 : i32
    %c0_i32_0 = arith.constant 0 : i32
    %c0_i32_1 = arith.constant 0 : i32
    return %c0_i32, %c0_i32_0 : i32, i32
  }
  func.func @transform_3(%arg0: i32) -> (i32, i32) {
    %c0_i32 = arith.constant 0 : i32
    %c0_i32_0 = arith.constant 0 : i32
    %c0_i32_1 = arith.constant 0 : i32
    return %c0_i32, %c0_i32_0 : i32, i32
  }
  func.func @transform_4(%arg0: i32) -> (i32, i32) {
    %c0_i32 = arith.constant 0 : i32
    %c0_i32_0 = arith.constant 0 : i32
    %c0_i32_1 = arith.constant 0 : i32
    return %c0_i32, %c0_i32_0 : i32, i32
  }
  func.func @transform_5(%arg0: i32) -> (i32, i32) {
    %c0_i32 = arith.constant 0 : i32
    %c0_i32_0 = arith.constant 0 : i32
    %c0_i32_1 = arith.constant 0 : i32
    return %c0_i32, %c0_i32_0 : i32, i32
  }
  func.func @transform_6(%arg0: i32) -> (i32, i32) {
    %c0_i32 = arith.constant 0 : i32
    %c0_i32_0 = arith.constant 0 : i32
    %c0_i32_1 = arith.constant 0 : i32
    return %c0_i32, %c0_i32_0 : i32, i32
  }
  func.func @transform_7(%arg0: i32) -> (i32, i32) {
    %c0_i32 = arith.constant 0 : i32
    %c0_i32_0 = arith.constant 0 : i32
    return %arg0, %c0_i32 : i32, i32
  }
}

</mosaic_0001>

<llo_original>
// kernel: tpu_custom_call.1
$region0: #{tpu_custom_call.1}
  #allocation0 [shape = 'u32[]', space=smem, size = 0x4, offset = 0x4, fixed_abs, tag = 'smem constant byte address 0x4 - core index']
  #allocation1 [shape = 'u32[144,128]{1,0:T(1,128)}', space=vmem, size = 0x12000, scoped, tag = 'internal scratch']
  #allocation2 [shape = 'f32[1,1]{1,0:T(1,128)S(1)}', space=vmem, size = 0x200, scoped, tag = 'scoped memory for tpu_custom_call.1']
  %s0 = inlined_call_operand.vmem [shape: f32[128,16], index: 0, kind: input, shape index: {}]
  %s1 = inlined_call_operand.vmem [shape: f32[16,128], index: 1, kind: input, shape index: {}]
  %s2 = inlined_call_operand.vmem [shape: f32[1,128], index: 2, kind: input, shape index: {}]
  %s3 = inlined_call_operand.vmem [shape: f32[128,128], index: 3, kind: input, shape index: {}]
  %s4 = inlined_call_operand.vmem [shape: f32[1,128], index: 4, kind: input, shape index: {}]
  %s5 = inlined_call_operand.vmem [shape: f32[128,1], index: 5, kind: input, shape index: {}]
  %s6 = inlined_call_operand.<no memory space> [shape: f32[1,1], index: 6, kind: input, shape index: {}]
  %s7 = inlined_call_operand.hbm [shape: f32[1,128], index: 7, kind: output, shape index: {}]
  %s8 = sld [smem:[#allocation0]]
  $region38: #{tpu_custom_call.1} parent=0
    _
  %s10 = ssub.s32 1, %s8
  %s11 = scalar_select 0, %s10, %s8
  %v12 = vstv %s6
  %13 = vst [vmem:[#allocation2] sm:$0x1] %v12
  $region1: #{tpu_custom_call.1} parent=0
    #allocation3 [shape = 'u8[512]{0}', space=vmem, size = 0x400, scoped, tag = 'output window, operand 0, single buffered']
    #allocation4 [shape = 's32[1]{0}', space=sflag, size = 0x4, scoped, tag = 'scoped memory for tpu_custom_call.1']
    %14 = vsyncpa [#allocation4], 0
    // Predicated region
    $region2: #{tpu_custom_call.1} parent=1 // pred_check
      _
    $region3: #{tpu_custom_call.1} parent=1 // pred_check_branch
      %16 = sbr.rel (0) target = $region5
    $region4: #{tpu_custom_call.1} parent=1 // pred_region
      _
    $region5: #{tpu_custom_call.1} parent=1 // pred_fallthru
      _
    // Predicated region
    $region6: #{tpu_custom_call.1} parent=1 // pred_check
      _
    $region7: #{tpu_custom_call.1} parent=1 // pred_check_branch
      %18 = sbr.rel (0) target = $region9
    $region8: #{tpu_custom_call.1} parent=1 // pred_region
      _
    $region9: #{tpu_custom_call.1} parent=1 // pred_fallthru
      _
    // Predicated region
    $region10: #{tpu_custom_call.1} parent=1 // pred_check
      _
    $region11: #{tpu_custom_call.1} parent=1 // pred_check_branch
      %20 = sbr.rel (0) target = $region13
    $region12: #{tpu_custom_call.1} parent=1 // pred_region
      _
    $region13: #{tpu_custom_call.1} parent=1 // pred_fallthru
      _
    // Predicated region
    $region14: #{tpu_custom_call.1} parent=1 // pred_check
      _
    $region15: #{tpu_custom_call.1} parent=1 // pred_check_branch
      %22 = sbr.rel (0) target = $region17
    $region16: #{tpu_custom_call.1} parent=1 // pred_region
      _
    $region17: #{tpu_custom_call.1} parent=1 // pred_fallthru
      _
    // Predicated region
    $region18: #{tpu_custom_call.1} parent=1 // pred_check
      _
    $region19: #{tpu_custom_call.1} parent=1 // pred_check_branch
      %24 = sbr.rel (0) target = $region21
    $region20: #{tpu_custom_call.1} parent=1 // pred_region
      _
    $region21: #{tpu_custom_call.1} parent=1 // pred_fallthru
      _
    // Predicated region
    $region22: #{tpu_custom_call.1} parent=1 // pred_check
      _
    $region23: #{tpu_custom_call.1} parent=1 // pred_check_branch
      %26 = sbr.rel (0) target = $region25
    $region24: #{tpu_custom_call.1} parent=1 // pred_region
      _
    $region25: #{tpu_custom_call.1} parent=1 // pred_fallthru
      _
    // Predicated region
    $region26: #{tpu_custom_call.1} parent=1 // pred_check
      _
    $region27: #{tpu_custom_call.1} parent=1 // pred_check_branch
      %28 = sbr.rel (0) target = $region29
    $region28: #{tpu_custom_call.1} parent=1 // pred_region
      _
    $region29: #{tpu_custom_call.1} parent=1 // pred_fallthru
      _
    %v29 = vld [vmem:[%s0] sm:$0xff]
    %v30 = vld [vmem:[%s0 + $0x8] sm:$0xff]
    %v31 = vld [vmem:[%s0 + $0x10] sm:$0xff]
    %v32 = vld [vmem:[%s0 + $0x18] sm:$0xff]
    %v33 = vld [vmem:[%s0 + $0x20] sm:$0xff]
    %v34 = vld [vmem:[%s0 + $0x28] sm:$0xff]
    %v35 = vld [vmem:[%s0 + $0x30] sm:$0xff]
    %v36 = vld [vmem:[%s0 + $0x38] sm:$0xff]
    %v37 = vld [vmem:[%s0 + $0x40] sm:$0xff]
    %v38 = vld [vmem:[%s0 + $0x48] sm:$0xff]
    %v39 = vld [vmem:[%s0 + $0x50] sm:$0xff]
    %v40 = vld [vmem:[%s0 + $0x58] sm:$0xff]
    %v41 = vld [vmem:[%s0 + $0x60] sm:$0xff]
    %v42 = vld [vmem:[%s0 + $0x68] sm:$0xff]
    %v43 = vld [vmem:[%s0 + $0x70] sm:$0xff]
    %v44 = vld [vmem:[%s0 + $0x78] sm:$0xff]
    %v45 = vld [vmem:[%s1] sm:$0xff]
    %v46 = vld [vmem:[%s1 + $0x8] sm:$0xff]
    %v47 = vld [vmem:[%s2] sm:$0x1]
    %v49 = vlaneseq
    %v50 = vshrl.u32 %v49, 7
    %v51 = vsub.s32 0, %v50
    %v52 = vrot.slane %v47, %v51
    %vm54 = vcmask 130048
    %v56 = vsel %vm54, %v29, 0
    %v59 = vsel %vm54, %v30, 0
    %v62 = vsel %vm54, %v31, 0
    %v65 = vsel %vm54, %v32, 0
    %v68 = vsel %vm54, %v33, 0
    %v71 = vsel %vm54, %v34, 0
    %v74 = vsel %vm54, %v35, 0
    %v77 = vsel %vm54, %v36, 0
    %v80 = vsel %vm54, %v37, 0
    %v83 = vsel %vm54, %v38, 0
    %v86 = vsel %vm54, %v39, 0
    %v89 = vsel %vm54, %v40, 0
    %v92 = vsel %vm54, %v41, 0
    %v95 = vsel %vm54, %v42, 0
    %v98 = vsel %vm54, %v43, 0
    %v101 = vsel %vm54, %v44, 0
    %103 = vmatprep.subr.mxu0 0.0
    %104 = vmatpush1.msra.mxu0 0.0
    %105 = vmatprep.subr.mxu0 0.0
    %106 = vmatpush1.msra.mxu0 0.0
    %107 = vmatprep.subr.mxu0 0.0
    %108 = vmatpush1.msra.mxu0 0.0
    %109 = vmatprep.subr.mxu0 0.0
    %110 = vmatpush1.msra.mxu0 0.0
    %111 = vmatprep.subr.mxu0 0.0
    %112 = vmatpush1.msra.mxu0 0.0
    %113 = vmatprep.subr.mxu0 0.0
    %114 = vmatpush1.msra.mxu0 0.0
    %115 = vmatprep.subr.mxu0 0.0
    %116 = vmatpush1.msra.mxu0 0.0
    %117 = vmatprep.subr.mxu0 0.0
    %118 = vmatpush1.msra.mxu0 0.0
    %119 = vmatprep.subr.mxu0 0.0
    %120 = vmatpush1.msra.mxu0 0.0
    %121 = vmatprep.subr.mxu0 0.0
    %122 = vmatpush1.msra.mxu0 0.0
    %123 = vmatprep.subr.mxu0 0.0
    %124 = vmatpush1.msra.mxu0 0.0
    %125 = vmatprep.subr.mxu0 0.0
    %126 = vmatpush1.msra.mxu0 0.0
    %127 = vmatprep.subr.mxu0 0.0
    %128 = vmatpush1.msra.mxu0 0.0
    %129 = vmatprep.subr.mxu0 0.0
    %130 = vmatpush1.msra.mxu0 0.0
    %131 = vmatprep.subr.mxu0 0.0
    %132 = vmatpush1.msra.mxu0 %v46
    %133 = vmatprep.subr.mxu0 0.0
    %134 = vmatpush1.msra.mxu0 %v45
    %135 = vmatprep.subr.mxu0 0.0
    %136 = vmatpush2.msra.mxu0 0.0
    %137 = vmatprep.subr.mxu0 0.0
    %138 = vmatpush2.msra.mxu0 0.0
    %139 = vmatprep.subr.mxu0 0.0
    %140 = vmatpush2.msra.mxu0 0.0
    %141 = vmatprep.subr.mxu0 0.0
    %142 = vmatpush2.msra.mxu0 0.0
    %143 = vmatprep.subr.mxu0 0.0
    %144 = vmatpush2.msra.mxu0 0.0
    %145 = vmatprep.subr.mxu0 0.0
    %146 = vmatpush2.msra.mxu0 0.0
    %147 = vmatprep.subr.mxu0 0.0
    %148 = vmatpush2.msra.mxu0 0.0
    %149 = vmatprep.subr.mxu0 0.0
    %150 = vmatpush2.msra.mxu0 0.0
    %151 = vmatprep.subr.mxu0 0.0
    %152 = vmatpush2.msra.mxu0 0.0
    %153 = vmatprep.subr.mxu0 0.0
    %154 = vmatpush2.msra.mxu0 0.0
    %155 = vmatprep.subr.mxu0 0.0
    %156 = vmatpush2.msra.mxu0 0.0
    %157 = vmatprep.subr.mxu0 0.0
    %158 = vmatpush2.msra.mxu0 0.0
    %159 = vmatprep.subr.mxu0 0.0
    %160 = vmatpush2.msra.mxu0 0.0
    %161 = vmatprep.subr.mxu0 0.0
    %162 = vmatpush2.msra.mxu0 0.0
    %163 = vmatprep.subr.mxu0 0.0
    %164 = vmatpush2.msra.mxu0 0.0
    %165 = vmatprep.subr.mxu0 0.0
    %166 = vmatpush2.msra.mxu0 0.0
    %167 = vmatprep.mubr.f32.mxu0 0.0
    %168 = vmatmul.mubr.f32.gmra.mxu0 %v56
    %v169 = vpop.f32.mrf.mxu0
    %v170 = vadd.f32 %v52, %v169
    %v171 = vpop.f32.mrf.mxu0
    %172 = vmatprep.mubr.f32.mxu0 0.0
    %173 = vmatmul.mubr.f32.gmra.mxu0 %v59
    %v174 = vpop.f32.mrf.mxu0
    %v175 = vadd.f32 %v52, %v174
    %v176 = vpop.f32.mrf.mxu0
    %177 = vmatprep.mubr.f32.mxu0 0.0
    %178 = vmatmul.mubr.f32.gmra.mxu0 %v62
    %v179 = vpop.f32.mrf.mxu0
    %v180 = vadd.f32 %v52, %v179
    %v181 = vpop.f32.mrf.mxu0
    %182 = vmatprep.mubr.f32.mxu0 0.0
    %183 = vmatmul.mubr.f32.gmra.mxu0 %v65
    %v184 = vpop.f32.mrf.mxu0
    %v185 = vadd.f32 %v52, %v184
    %v186 = vpop.f32.mrf.mxu0
    %187 = vmatprep.mubr.f32.mxu0 0.0
    %188 = vmatmul.mubr.f32.gmra.mxu0 %v68
    %v189 = vpop.f32.mrf.mxu0
    %v190 = vadd.f32 %v52, %v189
    %v191 = vpop.f32.mrf.mxu0
    %192 = vmatprep.mubr.f32.mxu0 0.0
    %193 = vmatmul.mubr.f32.gmra.mxu0 %v71
    %v194 = vpop.f32.mrf.mxu0
    %v195 = vadd.f32 %v52, %v194
    %v196 = vpop.f32.mrf.mxu0
    %197 = vmatprep.mubr.f32.mxu0 0.0
    %198 = vmatmul.mubr.f32.gmra.mxu0 %v74
    %v199 = vpop.f32.mrf.mxu0
    %v200 = vadd.f32 %v52, %v199
    %v201 = vpop.f32.mrf.mxu0
    %202 = vmatprep.mubr.f32.mxu0 0.0
    %203 = vmatmul.mubr.f32.gmra.mxu0 %v77
    %v204 = vpop.f32.mrf.mxu0
    %v205 = vadd.f32 %v52, %v204
    %v206 = vpop.f32.mrf.mxu0
    %207 = vmatprep.mubr.f32.mxu0 0.0
    %208 = vmatmul.mubr.f32.gmra.mxu0 %v80
    %v209 = vpop.f32.mrf.mxu0
    %v210 = vadd.f32 %v52, %v209
    %v211 = vpop.f32.mrf.mxu0
    %212 = vmatprep.mubr.f32.mxu0 0.0
    %213 = vmatmul.mubr.f32.gmra.mxu0 %v83
    %v214 = vpop.f32.mrf.mxu0
    %v215 = vadd.f32 %v52, %v214
    %v216 = vpop.f32.mrf.mxu0
    %217 = vmatprep.mubr.f32.mxu0 0.0
    %218 = vmatmul.mubr.f32.gmra.mxu0 %v86
    %v219 = vpop.f32.mrf.mxu0
    %v220 = vadd.f32 %v52, %v219
    %v221 = vpop.f32.mrf.mxu0
    %222 = vmatprep.mubr.f32.mxu0 0.0
    %223 = vmatmul.mubr.f32.gmra.mxu0 %v89
    %v224 = vpop.f32.mrf.mxu0
    %v225 = vadd.f32 %v52, %v224
    %v226 = vpop.f32.mrf.mxu0
    %227 = vmatprep.mubr.f32.mxu0 0.0
    %228 = vmatmul.mubr.f32.gmra.mxu0 %v92
    %v229 = vpop.f32.mrf.mxu0
    %v230 = vadd.f32 %v52, %v229
    %v231 = vpop.f32.mrf.mxu0
    %232 = vmatprep.mubr.f32.mxu0 0.0
    %233 = vmatmul.mubr.f32.gmra.mxu0 %v95
    %v234 = vpop.f32.mrf.mxu0
    %v235 = vadd.f32 %v52, %v234
    %v236 = vpop.f32.mrf.mxu0
    %237 = vmatprep.mubr.f32.mxu0 0.0
    %238 = vmatmul.mubr.f32.gmra.mxu0 %v98
    %v239 = vpop.f32.mrf.mxu0
    %v240 = vadd.f32 %v52, %v239
    %v241 = vpop.f32.mrf.mxu0
    %242 = vmatprep.mubr.f32.mxu0 0.0
    %243 = vmatmul.mubr.f32.gmra.mxu0 %v101
    %v244 = vpop.f32.mrf.mxu0
    %v245 = vadd.f32 %v52, %v244
    %v246 = vpop.f32.mrf.mxu0
    %247 = vdwg.mxu0
    %v248 = vmax.f32 %v170, 0.0
    %v249 = vmax.f32 %v175, 0.0
    %v250 = vmax.f32 %v180, 0.0
    %v251 = vmax.f32 %v185, 0.0
    %v252 = vmax.f32 %v190, 0.0
    %v253 = vmax.f32 %v195, 0.0
    %v254 = vmax.f32 %v200, 0.0
    %v255 = vmax.f32 %v205, 0.0
    %v256 = vmax.f32 %v210, 0.0
    %v257 = vmax.f32 %v215, 0.0
    %v258 = vmax.f32 %v220, 0.0
    %v259 = vmax.f32 %v225, 0.0
    %v260 = vmax.f32 %v230, 0.0
    %v261 = vmax.f32 %v235, 0.0
    %v262 = vmax.f32 %v240, 0.0
    %v263 = vmax.f32 %v245, 0.0
    %v264 = vld [vmem:[%s3] sm:$0xff]
    %v265 = vld [vmem:[%s3 + $0x8] sm:$0xff]
    %v266 = vld [vmem:[%s3 + $0x10] sm:$0xff]
    %v267 = vld [vmem:[%s3 + $0x18] sm:$0xff]
    %v268 = vld [vmem:[%s3 + $0x20] sm:$0xff]
    %v269 = vld [vmem:[%s3 + $0x28] sm:$0xff]
    %v270 = vld [vmem:[%s3 + $0x30] sm:$0xff]
    %v271 = vld [vmem:[%s3 + $0x38] sm:$0xff]
    %v272 = vld [vmem:[%s3 + $0x40] sm:$0xff]
    %v273 = vld [vmem:[%s3 + $0x48] sm:$0xff]
    %v274 = vld [vmem:[%s3 + $0x50] sm:$0xff]
    %v275 = vld [vmem:[%s3 + $0x58] sm:$0xff]
    %v276 = vld [vmem:[%s3 + $0x60] sm:$0xff]
    %v277 = vld [vmem:[%s3 + $0x68] sm:$0xff]
    %v278 = vld [vmem:[%s3 + $0x70] sm:$0xff]
    %v279 = vld [vmem:[%s3 + $0x78] sm:$0xff]
    %v280 = vld [vmem:[%s4] sm:$0x1]
    %v282 = vlaneseq
    %v283 = vshrl.u32 %v282, 7
    %v284 = vsub.s32 0, %v283
    %v285 = vrot.slane %v280, %v284
    %287 = vmatprep.subr.mxu0 0.0
    %288 = vmatpush1.msra.mxu0 %v279
    %289 = vmatprep.subr.mxu0 0.0
    %290 = vmatpush1.msra.mxu0 %v278
    %291 = vmatprep.subr.mxu0 0.0
    %292 = vmatpush1.msra.mxu0 %v277
    %293 = vmatprep.subr.mxu0 0.0
    %294 = vmatpush1.msra.mxu0 %v276
    %295 = vmatprep.subr.mxu0 0.0
    %296 = vmatpush1.msra.mxu0 %v275
    %297 = vmatprep.subr.mxu0 0.0
    %298 = vmatpush1.msra.mxu0 %v274
    %299 = vmatprep.subr.mxu0 0.0
    %300 = vmatpush1.msra.mxu0 %v273
    %301 = vmatprep.subr.mxu0 0.0
    %302 = vmatpush1.msra.mxu0 %v272
    %303 = vmatprep.subr.mxu0 0.0
    %304 = vmatpush1.msra.mxu0 %v271
    %305 = vmatprep.subr.mxu0 0.0
    %306 = vmatpush1.msra.mxu0 %v270
    %307 = vmatprep.subr.mxu0 0.0
    %308 = vmatpush1.msra.mxu0 %v269
    %309 = vmatprep.subr.mxu0 0.0
    %310 = vmatpush1.msra.mxu0 %v268
    %311 = vmatprep.subr.mxu0 0.0
    %312 = vmatpush1.msra.mxu0 %v267
    %313 = vmatprep.subr.mxu0 0.0
    %314 = vmatpush1.msra.mxu0 %v266
    %315 = vmatprep.subr.mxu0 0.0
    %316 = vmatpush1.msra.mxu0 %v265
    %317 = vmatprep.subr.mxu0 0.0
    %318 = vmatpush1.msra.mxu0 %v264
    %319 = vmatprep.subr.mxu0 0.0
    %320 = vmatpush2.msra.mxu0 0.0
    %321 = vmatprep.subr.mxu0 0.0
    %322 = vmatpush2.msra.mxu0 0.0
    %323 = vmatprep.subr.mxu0 0.0
    %324 = vmatpush2.msra.mxu0 0.0
    %325 = vmatprep.subr.mxu0 0.0
    %326 = vmatpush2.msra.mxu0 0.0
    %327 = vmatprep.subr.mxu0 0.0
    %328 = vmatpush2.msra.mxu0 0.0
    %329 = vmatprep.subr.mxu0 0.0
    %330 = vmatpush2.msra.mxu0 0.0
    %331 = vmatprep.subr.mxu0 0.0
    %332 = vmatpush2.msra.mxu0 0.0
    %333 = vmatprep.subr.mxu0 0.0
    %334 = vmatpush2.msra.mxu0 0.0
    %335 = vmatprep.subr.mxu0 0.0
    %336 = vmatpush2.msra.mxu0 0.0
    %337 = vmatprep.subr.mxu0 0.0
    %338 = vmatpush2.msra.mxu0 0.0
    %339 = vmatprep.subr.mxu0 0.0
    %340 = vmatpush2.msra.mxu0 0.0
    %341 = vmatprep.subr.mxu0 0.0
    %342 = vmatpush2.msra.mxu0 0.0
    %343 = vmatprep.subr.mxu0 0.0
    %344 = vmatpush2.msra.mxu0 0.0
    %345 = vmatprep.subr.mxu0 0.0
    %346 = vmatpush2.msra.mxu0 0.0
    %347 = vmatprep.subr.mxu0 0.0
    %348 = vmatpush2.msra.mxu0 0.0
    %349 = vmatprep.subr.mxu0 0.0
    %350 = vmatpush2.msra.mxu0 0.0
    %351 = vmatprep.mubr.f32.mxu0 0.0
    %352 = vmatmul.mubr.f32.gmra.mxu0 %v248
    %v353 = vpop.f32.mrf.mxu0
    %v354 = vadd.f32 %v285, %v353
    %v355 = vpop.f32.mrf.mxu0
    %356 = vmatprep.mubr.f32.mxu0 0.0
    %357 = vmatmul.mubr.f32.gmra.mxu0 %v249
    %v358 = vpop.f32.mrf.mxu0
    %v359 = vadd.f32 %v285, %v358
    %v360 = vpop.f32.mrf.mxu0
    %361 = vmatprep.mubr.f32.mxu0 0.0
    %362 = vmatmul.mubr.f32.gmra.mxu0 %v250
    %v363 = vpop.f32.mrf.mxu0
    %v364 = vadd.f32 %v285, %v363
    %v365 = vpop.f32.mrf.mxu0
    %366 = vmatprep.mubr.f32.mxu0 0.0
    %367 = vmatmul.mubr.f32.gmra.mxu0 %v251
    %v368 = vpop.f32.mrf.mxu0
    %v369 = vadd.f32 %v285, %v368
    %v370 = vpop.f32.mrf.mxu0
    %371 = vmatprep.mubr.f32.mxu0 0.0
    %372 = vmatmul.mubr.f32.gmra.mxu0 %v252
    %v373 = vpop.f32.mrf.mxu0
    %v374 = vadd.f32 %v285, %v373
    %v375 = vpop.f32.mrf.mxu0
    %376 = vmatprep.mubr.f32.mxu0 0.0
    %377 = vmatmul.mubr.f32.gmra.mxu0 %v253
    %v378 = vpop.f32.mrf.mxu0
    %v379 = vadd.f32 %v285, %v378
    %v380 = vpop.f32.mrf.mxu0
    %381 = vmatprep.mubr.f32.mxu0 0.0
    %382 = vmatmul.mubr.f32.gmra.mxu0 %v254
    %v383 = vpop.f32.mrf.mxu0
    %v384 = vadd.f32 %v285, %v383
    %v385 = vpop.f32.mrf.mxu0
    %386 = vmatprep.mubr.f32.mxu0 0.0
    %387 = vmatmul.mubr.f32.gmra.mxu0 %v255
    %v388 = vpop.f32.mrf.mxu0
    %v389 = vadd.f32 %v285, %v388
    %v390 = vpop.f32.mrf.mxu0
    %391 = vmatprep.mubr.f32.mxu0 0.0
    %392 = vmatmul.mubr.f32.gmra.mxu0 %v256
    %v393 = vpop.f32.mrf.mxu0
    %v394 = vadd.f32 %v285, %v393
    %v395 = vpop.f32.mrf.mxu0
    %396 = vmatprep.mubr.f32.mxu0 0.0
    %397 = vmatmul.mubr.f32.gmra.mxu0 %v257
    %v398 = vpop.f32.mrf.mxu0
    %v399 = vadd.f32 %v285, %v398
    %v400 = vpop.f32.mrf.mxu0
    %401 = vmatprep.mubr.f32.mxu0 0.0
    %402 = vmatmul.mubr.f32.gmra.mxu0 %v258
    %v403 = vpop.f32.mrf.mxu0
    %v404 = vadd.f32 %v285, %v403
    %v405 = vpop.f32.mrf.mxu0
    %406 = vmatprep.mubr.f32.mxu0 0.0
    %407 = vmatmul.mubr.f32.gmra.mxu0 %v259
    %v408 = vpop.f32.mrf.mxu0
    %v409 = vadd.f32 %v285, %v408
    %v410 = vpop.f32.mrf.mxu0
    %411 = vmatprep.mubr.f32.mxu0 0.0
    %412 = vmatmul.mubr.f32.gmra.mxu0 %v260
    %v413 = vpop.f32.mrf.mxu0
    %v414 = vadd.f32 %v285, %v413
    %v415 = vpop.f32.mrf.mxu0
    %416 = vmatprep.mubr.f32.mxu0 0.0
    %417 = vmatmul.mubr.f32.gmra.mxu0 %v261
    %v418 = vpop.f32.mrf.mxu0
    %v419 = vadd.f32 %v285, %v418
    %v420 = vpop.f32.mrf.mxu0
    %421 = vmatprep.mubr.f32.mxu0 0.0
    %422 = vmatmul.mubr.f32.gmra.mxu0 %v262
    %v423 = vpop.f32.mrf.mxu0
    %v424 = vadd.f32 %v285, %v423
    %v425 = vpop.f32.mrf.mxu0
    %426 = vmatprep.mubr.f32.mxu0 0.0
    %427 = vmatmul.mubr.f32.gmra.mxu0 %v263
    %v428 = vpop.f32.mrf.mxu0
    %v429 = vadd.f32 %v285, %v428
    %v430 = vpop.f32.mrf.mxu0
    %431 = vdwg.mxu0
    %v432 = vmax.f32 %v354, 0.0
    %v433 = vmax.f32 %v359, 0.0
    %v434 = vmax.f32 %v364, 0.0
    %v435 = vmax.f32 %v369, 0.0
    %v436 = vmax.f32 %v374, 0.0
    %v437 = vmax.f32 %v379, 0.0
    %v438 = vmax.f32 %v384, 0.0
    %v439 = vmax.f32 %v389, 0.0
    %v440 = vmax.f32 %v394, 0.0
    %v441 = vmax.f32 %v399, 0.0
    %v442 = vmax.f32 %v404, 0.0
    %v443 = vmax.f32 %v409, 0.0
    %v444 = vmax.f32 %v414, 0.0
    %v445 = vmax.f32 %v419, 0.0
    %v446 = vmax.f32 %v424, 0.0
    %v447 = vmax.f32 %v429, 0.0
    %448 = vxpose.xlu0.b32.start [1/16] %v432, 128
    %449 = vxpose.xlu0.b32.cont [2/16] %v433, 128
    %450 = vxpose.xlu0.b32.cont [3/16] %v434, 128
    %451 = vxpose.xlu0.b32.cont [4/16] %v435, 128
    %452 = vxpose.xlu0.b32.cont [5/16] %v436, 128
    %453 = vxpose.xlu0.b32.cont [6/16] %v437, 128
    %454 = vxpose.xlu0.b32.cont [7/16] %v438, 128
    %455 = vxpose.xlu0.b32.cont [8/16] %v439, 128
    %456 = vxpose.xlu0.b32.cont [9/16] %v440, 128
    %457 = vxpose.xlu0.b32.cont [10/16] %v441, 128
    %458 = vxpose.xlu0.b32.cont [11/16] %v442, 128
    %459 = vxpose.xlu0.b32.cont [12/16] %v443, 128
    %460 = vxpose.xlu0.b32.cont [13/16] %v444, 128
    %461 = vxpose.xlu0.b32.cont [14/16] %v445, 128
    %462 = vxpose.xlu0.b32.cont [15/16] %v446, 128
    %463 = vxpose.xlu0.b32.end [16/16] %v447, 128
    %v464 = vpop.trf.xlu0
    %v465 = vpop.trf.xlu0
    %v466 = vpop.trf.xlu0
    %v467 = vpop.trf.xlu0
    %v468 = vpop.trf.xlu0
    %v469 = vpop.trf.xlu0
    %v470 = vpop.trf.xlu0
    %v471 = vpop.trf.xlu0
    %v472 = vpop.trf.xlu0
    %v473 = vpop.trf.xlu0
    %v474 = vpop.trf.xlu0
    %v475 = vpop.trf.xlu0
    %v476 = vpop.trf.xlu0
    %v477 = vpop.trf.xlu0
    %v478 = vpop.trf.xlu0
    %v479 = vpop.trf.xlu0
    %v480 = vld [vmem:[%s5] sm:$0xff]
    %v481 = vld [vmem:[%s5 + $0x8] sm:$0xff]
    %v482 = vld [vmem:[%s5 + $0x10] sm:$0xff]
    %v483 = vld [vmem:[%s5 + $0x18] sm:$0xff]
    %v484 = vld [vmem:[%s5 + $0x20] sm:$0xff]
    %v485 = vld [vmem:[%s5 + $0x28] sm:$0xff]
    %v486 = vld [vmem:[%s5 + $0x30] sm:$0xff]
    %v487 = vld [vmem:[%s5 + $0x38] sm:$0xff]
    %v488 = vld [vmem:[%s5 + $0x40] sm:$0xff]
    %v489 = vld [vmem:[%s5 + $0x48] sm:$0xff]
    %v490 = vld [vmem:[%s5 + $0x50] sm:$0xff]
    %v491 = vld [vmem:[%s5 + $0x58] sm:$0xff]
    %v492 = vld [vmem:[%s5 + $0x60] sm:$0xff]
    %v493 = vld [vmem:[%s5 + $0x68] sm:$0xff]
    %v494 = vld [vmem:[%s5 + $0x70] sm:$0xff]
    %v495 = vld [vmem:[%s5 + $0x78] sm:$0xff]
    %497 = vset.pattern.permute.xlu0 0
    %498 = vperm.xlu0 %497, %v480
    %v499 = vpop.permute.xlu0 %498
    %502 = vset.pattern.permute.xlu0 0
    %503 = vperm.xlu0 %502, %v481
    %v504 = vpop.permute.xlu0 %503
    %507 = vset.pattern.permute.xlu0 0
    %508 = vperm.xlu0 %507, %v482
    %v509 = vpop.permute.xlu0 %508
    %512 = vset.pattern.permute.xlu0 0
    %513 = vperm.xlu0 %512, %v483
    %v514 = vpop.permute.xlu0 %513
    %517 = vset.pattern.permute.xlu0 0
    %518 = vperm.xlu0 %517, %v484
    %v519 = vpop.permute.xlu0 %518
    %522 = vset.pattern.permute.xlu0 0
    %523 = vperm.xlu0 %522, %v485
    %v524 = vpop.permute.xlu0 %523
    %527 = vset.pattern.permute.xlu0 0
    %528 = vperm.xlu0 %527, %v486
    %v529 = vpop.permute.xlu0 %528
    %532 = vset.pattern.permute.xlu0 0
    %533 = vperm.xlu0 %532, %v487
    %v534 = vpop.permute.xlu0 %533
    %537 = vset.pattern.permute.xlu0 0
    %538 = vperm.xlu0 %537, %v488
    %v539 = vpop.permute.xlu0 %538
    %542 = vset.pattern.permute.xlu0 0
    %543 = vperm.xlu0 %542, %v489
    %v544 = vpop.permute.xlu0 %543
    %547 = vset.pattern.permute.xlu0 0
    %548 = vperm.xlu0 %547, %v490
    %v549 = vpop.permute.xlu0 %548
    %552 = vset.pattern.permute.xlu0 0
    %553 = vperm.xlu0 %552, %v491
    %v554 = vpop.permute.xlu0 %553
    %557 = vset.pattern.permute.xlu0 0
    %558 = vperm.xlu0 %557, %v492
    %v559 = vpop.permute.xlu0 %558
    %562 = vset.pattern.permute.xlu0 0
    %563 = vperm.xlu0 %562, %v493
    %v564 = vpop.permute.xlu0 %563
    %567 = vset.pattern.permute.xlu0 0
    %568 = vperm.xlu0 %567, %v494
    %v569 = vpop.permute.xlu0 %568
    %572 = vset.pattern.permute.xlu0 0
    %573 = vperm.xlu0 %572, %v495
    %v574 = vpop.permute.xlu0 %573
    %v576 = vmul.f32 %v464, %v499
    %v577 = vmul.f32 %v465, %v504
    %v578 = vmul.f32 %v466, %v509
    %v579 = vmul.f32 %v467, %v514
    %v580 = vmul.f32 %v468, %v519
    %v581 = vmul.f32 %v469, %v524
    %v582 = vmul.f32 %v470, %v529
    %v583 = vmul.f32 %v471, %v534
    %v584 = vmul.f32 %v472, %v539
    %v585 = vmul.f32 %v473, %v544
    %v586 = vmul.f32 %v474, %v549
    %v587 = vmul.f32 %v475, %v554
    %v588 = vmul.f32 %v476, %v559
    %v589 = vmul.f32 %v477, %v564
    %v590 = vmul.f32 %v478, %v569
    %v591 = vmul.f32 %v479, %v574
    %v592 = vadd.f32 %v576, %v577
    %v593 = vadd.f32 %v592, %v578
    %v594 = vadd.f32 %v593, %v579
    %v595 = vadd.f32 %v594, %v580
    %v596 = vadd.f32 %v595, %v581
    %v597 = vadd.f32 %v596, %v582
    %v598 = vadd.f32 %v597, %v583
    %v599 = vadd.f32 %v598, %v584
    %v600 = vadd.f32 %v599, %v585
    %v601 = vadd.f32 %v600, %v586
    %v602 = vadd.f32 %v601, %v587
    %v603 = vadd.f32 %v602, %v588
    %v604 = vadd.f32 %v603, %v589
    %v605 = vadd.f32 %v604, %v590
    %v606 = vadd.f32 %v605, %v591
    %v607 = vrot.slane %v606, 4
    %v608 = vadd.f32 %v606, %v607
    %v609 = vrot.slane %v608, 2
    %v610 = vadd.f32 %v608, %v609
    %v611 = vrot.slane %v610, 1
    %v612 = vadd.f32 %v610, %v611
    %v613 = vld [vmem:[#allocation2] sm:$0x1]
    %615 = vset.pattern.permute.xlu0 0
    %616 = vperm.xlu0 %615, %v613
    %v617 = vpop.permute.xlu0 %616
    %v619 = vlaneseq
    %v620 = vshrl.u32 %v619, 7
    %v621 = vsub.s32 0, %v620
    %v622 = vrot.slane %v617, %v621
    %v623 = vadd.f32 %v612, %v622
    %624 = vst [vmem:[#allocation3] sm:$0x1] %v623
    // Predicated region
    $region30: #{tpu_custom_call.1} parent=1 // pred_check
      _
    $region31: #{tpu_custom_call.1} parent=1 // pred_check_branch
      %626 = sbr.rel (0) target = $region33
    $region32: #{tpu_custom_call.1} parent=1 // pred_region
      %s628 = ssub.s32 16, 16
      %629 = vsyncadd [#allocation4], %s628
      %s631 = sshll.u32 [#allocation3], 4
      %s632 = int_to_ptr.vmem [resolvable:$true] %s631
      %634 = dma.vmem_to_hbm [thread:$0]  %s632, 16, %s7, [#allocation4]
    $region33: #{tpu_custom_call.1} parent=1 // pred_fallthru
      _
    // Predicated region
    $region34: #{tpu_custom_call.1} parent=1 // pred_check
      _
    $region35: #{tpu_custom_call.1} parent=1 // pred_check_branch
      %636 = sbr.rel (0) target = $region37
    $region36: #{tpu_custom_call.1} parent=1 // pred_region
      %637 = dma.done [#allocation4], 16
    $region37: #{tpu_custom_call.1} parent=1 // pred_fallthru
      _
    %638 = vsyncpa [#allocation4], 1

</llo_original>
